<compile_context>
chip_gen: v6e
topology: v6e:2x2x1
jax: 0.10.0
libtpu: 0.0.40
codegen_flags: <defaults>
</compile_context>

<pallas_src>
import functools

import jax
import jax.numpy as jnp
from jax import lax
from jax.experimental import pallas as pl
from jax.experimental.pallas import tpu as pltpu


# ------------------------------ fused kernel --------------------------------


def _fused_kernel(x_ref, w_ref, b_ref, a_ref, lw_ref, lb_ref, out_ref, *,
                  L, K, C, dilation_c):
    """All DepthwiseNet levels fused; processes one batch element.

    x_ref / out_ref : (1, C_pad, T_pad)  activation (zero-padded channels/time)
    w_ref           : (L, K, C_pad, 1)   depthwise conv taps
    b_ref           : (L, C_pad, 1)      conv bias
    a_ref           : (L, C_pad, 1)      per-channel PReLU slopes (0 for linear level)
    lw_ref          : (C_pad, C_pad)     LastBlock Linear weight (zero-padded)
    lb_ref          : (C_pad, 1)         LastBlock Linear bias   (zero-padded)
    """
    C_pad, T_pad = out_ref.shape[1], out_ref.shape[2]

    cur = x_ref[0].astype(jnp.float32)                       # (C_pad, T_pad) in VMEM
    w_all = w_ref[...]                                       # tiny, load once
    b_all = b_ref[...]
    a_all = a_ref[...]

    # Lane index, used to zero the wrap-around region of the causal rolls.
    t_idx = lax.broadcasted_iota(jnp.int32, (C_pad, T_pad), 1)

    for level in range(L):                                   # L small & static -> unrolled
        d = dilation_c ** level
        bias = b_all[level]                                  # (C_pad, 1)
        acc = jnp.broadcast_to(bias, (C_pad, T_pad)).astype(jnp.float32)

        for j in range(K):                                   # K taps, unrolled
            s = (K - 1 - j) * d                              # causal left shift
            if s == 0:
                xs = cur
            else:
                # XLU lane rotation + VPU mask: xs[t] = cur[t-s] for t>=s, else 0.
                xs = jnp.where(t_idx >= s,
                               pltpu.roll(cur, shift=s, axis=1),
                               0.0)
            acc = acc + w_all[level, j] * xs                 # (C_pad,1) * (C_pad,T_pad)

        last_is_linear = (level == L - 1) and (level != 0)
        if last_is_linear:
            z = acc + cur                                    # residual add
            lb = lb_ref[...]                                 # (C_pad, 1)
            if C_pad >= 64:
                # Channel-mixing Linear on the MXU for big C.
                cur = jnp.dot(lw_ref[...], z,
                              preferred_element_type=jnp.float32) + lb
            else:
                # Tiny C: explicit VPU MAC loop (MXU tile would be mostly padding).
                lw = lw_ref[...]
                y = jnp.broadcast_to(lb, (C_pad, T_pad)).astype(jnp.float32)
                for kk in range(C):                          # padded z-channels are zero
                    y = y + lw[:, kk:kk + 1] * z[kk:kk + 1, :]
                cur = y
        else:
            if level != 0:
                acc = acc + cur                              # TemporalBlock residual
            a = a_all[level]                                 # (C_pad, 1) PReLU slope
            cur = jnp.where(acc >= 0.0, acc, a * acc)

    out_ref[0] = cur.astype(out_ref.dtype)


# ------------------------------- wrapper -------------------------------------


def _round_up(x, m):
    return (x + m - 1) // m * m


def depthwise_net_forward(x, params, kernel_size, dilation_c):
    """x: (B, C, T) float32 -> (B, C, T) float32 with one fused pallas_call."""
    B, C, T = x.shape
    L = len(params)
    K = kernel_size

    C_pad = _round_up(C, 8)          # f32 sublane packing
    T_pad = _round_up(T, 128)        # lane packing -> unmasked stores

    def padc(p):                     # zero-pad the channel (first) axis to C_pad
        return jnp.pad(p, ((0, C_pad - C),) + ((0, 0),) * (p.ndim - 1))

    # Stack per-level parameters (padded channels carry zero weights/bias/slope,
    # so padded activation channels stay exactly zero through every level).
    w_all = jnp.stack([padc(p["w"]) for p in params])                 # (L, C_pad, K)
    w_all = jnp.transpose(w_all, (0, 2, 1))[..., None]                # (L, K, C_pad, 1)
    b_all = jnp.stack([padc(p["b"]) for p in params])                 # (L, C_pad, 1)
    a_all = jnp.stack([padc(p.get("a", jnp.zeros((C, 1), jnp.float32)))
                       for p in params])                              # (L, C_pad, 1)
    if L > 1:
        lw = jnp.pad(params[-1]["lw"], ((0, C_pad - C), (0, C_pad - C)))
        lb = padc(params[-1]["lb"])
    else:
        lw = jnp.zeros((C_pad, C_pad), jnp.float32)
        lb = jnp.zeros((C_pad, 1), jnp.float32)

    # Single lane/sublane-dense padded activation copy (replaces L per-level pads).
    xp = jnp.pad(x, ((0, 0), (0, C_pad - C), (0, T_pad - T)))

    kernel = functools.partial(_fused_kernel, L=L, K=K, C=C,
                               dilation_c=dilation_c)

    def full_spec(shape):
        return pl.BlockSpec(shape, lambda *_: (0,) * len(shape))

    out = pl.pallas_call(
        kernel,
        grid=(B,),
        in_specs=[
            pl.BlockSpec((1, C_pad, T_pad), lambda b: (b, 0, 0)),     # activation
            full_spec(w_all.shape),
            full_spec(b_all.shape),
            full_spec(a_all.shape),
            full_spec(lw.shape),
            full_spec(lb.shape),
        ],
        out_specs=pl.BlockSpec((1, C_pad, T_pad), lambda b: (b, 0, 0)),
        out_shape=jax.ShapeDtypeStruct((B, C_pad, T_pad), jnp.float32),
        compiler_params=pltpu.CompilerParams(
            dimension_semantics=("parallel",)),                       # v7x: 2 TCs
    )(xp, w_all, b_all, a_all, lw, lb)

    return out[:, :C, :T]


# --------------------------- parameter init ----------------------------------


def init_params(key, C, num_levels, K):
    """Deterministic parameters mirroring the PyTorch module's shapes/init."""
    params = []
    for level in range(num_levels):
        key, k1, k2, k3, k4 = jax.random.split(key, 5)
        p = {
            # Conv1d depthwise weight (C, 1, K) -> stored (C, K); N(0, 0.1)
            "w": 0.1 * jax.random.normal(k1, (C, K), jnp.float32),
            # Conv1d bias ~ U(-1/sqrt(K), 1/sqrt(K)); stored (C, 1)
            "b": (jax.random.uniform(k2, (C, 1), jnp.float32) * 2.0 - 1.0)
            / jnp.sqrt(float(K)),
        }
        if level == num_levels - 1 and level != 0:
            # LastBlock Linear(C, C): weight N(0, 0.01), bias ~ U(-1/sqrt(C), ..)
            p["lw"] = 0.01 * jax.random.normal(k3, (C, C), jnp.float32)
            p["lb"] = (jax.random.uniform(k4, (C, 1), jnp.float32) * 2.0 - 1.0
                       ) / jnp.sqrt(float(C))
        else:
            # PReLU per-channel, default init 0.25
            p["a"] = jnp.full((C, 1), 0.25, jnp.float32)
        params.append(p)
    return params


# ----------------------------- pure-JAX reference ----------------------------


def reference_forward(x, params, K, dilation_c):
    num_levels = len(params)
    T = x.shape[-1]
    out = x
    for level, p in enumerate(params):
        d = dilation_c ** level
        pad = (K - 1) * d
        xpad = jnp.pad(out, ((0, 0), (0, 0), (pad, 0)))
        conv = jnp.zeros_like(out) + p["b"][None, :, :]
        for j in range(K):
            s = (K - 1 - j) * d
            conv = conv + p["w"][:, j][None, :, None] * xpad[:, :, pad - s: pad - s + T]
        if level == num_levels - 1 and level != 0:
            z = (conv + out).transpose(0, 2, 1)            # (B, T, C)
            y = z @ p["lw"].T + p["lb"][:, 0][None, None, :]
            out = y.transpose(0, 2, 1)
        else:
            if level != 0:
                conv = conv + out
            a = p["a"][None, :, :]
            out = jnp.where(conv >= 0, conv, a * conv)
    return out


# ---------------------------------- main --------------------------------------


if __name__ == "__main__":
    B, C, T = 2, 4, 16                     # batch, channels (num_inputs), sequence
    num_levels, kernel_size, dilation_c = 3, 2, 2

    key = jax.random.PRNGKey(0)
    kx, kp = jax.random.split(key)
    x = jax.random.normal(kx, (B, C, T), jnp.float32)
    params = init_params(kp, C, num_levels, kernel_size)

    fwd = jax.jit(functools.partial(depthwise_net_forward,
                                    kernel_size=kernel_size,
                                    dilation_c=dilation_c))
    out = jax.block_until_ready(fwd(x, params))

    ref = reference_forward(x, params, kernel_size, dilation_c)
    assert out.shape == (B, C, T)
    assert bool(jnp.allclose(out, ref, rtol=1e-5, atol=1e-5)), "mismatch vs reference"

    print("KERNEL_OK")
</pallas_src>

<mosaic_0001>
module attributes {stable_mosaic.version = 11 : i64} {
  func.func @_fused_kernel(%arg0: i32, %arg1: memref<1x8x128xf32, #tpu.memory_space<vmem>>, %arg2: memref<3x2x8x1xf32, #tpu.memory_space<vmem>>, %arg3: memref<3x8x1xf32, #tpu.memory_space<vmem>>, %arg4: memref<3x8x1xf32, #tpu.memory_space<vmem>>, %arg5: memref<8x8xf32, #tpu.memory_space<vmem>>, %arg6: memref<8x1xf32, #tpu.memory_space<vmem>>, %arg7: memref<1x8x128xf32, #tpu.memory_space<vmem>>) attributes {dimension_semantics = [#tpu.dimension_semantics<parallel>], iteration_bounds = array<i64: 2>, scalar_prefetch = 0 : i64, scratch_operands = 0 : i64, tpu.core_type = #tpu.core_type<tc>, window_params = [{transform_indices = @transform_0, window_bounds = array<i64: 1, 8, 128>}, {pipeline_mode = #tpu.pipeline_mode<synchronous>, transform_indices = @transform_1, window_bounds = array<i64: 3, 2, 8, 1>}, {pipeline_mode = #tpu.pipeline_mode<synchronous>, transform_indices = @transform_2, window_bounds = array<i64: 3, 8, 1>}, {pipeline_mode = #tpu.pipeline_mode<synchronous>, transform_indices = @transform_3, window_bounds = array<i64: 3, 8, 1>}, {pipeline_mode = #tpu.pipeline_mode<synchronous>, transform_indices = @transform_4, window_bounds = array<i64: 8, 8>}, {pipeline_mode = #tpu.pipeline_mode<synchronous>, transform_indices = @transform_5, window_bounds = array<i64: 8, 1>}, {transform_indices = @transform_6, window_bounds = array<i64: 1, 8, 128>}]} {
    %c0 = arith.constant 0 : index
    %c0_0 = arith.constant 0 : index
    %c0_1 = arith.constant 0 : index
    %0 = vector.load %arg1[%c0, %c0_0, %c0_1] : memref<1x8x128xf32, #tpu.memory_space<vmem>>, vector<1x8x128xf32>
    %1 = vector.shape_cast %0 : vector<1x8x128xf32> to vector<8x128xf32>
    %c0_2 = arith.constant 0 : index
    %c0_3 = arith.constant 0 : index
    %c0_4 = arith.constant 0 : index
    %c0_5 = arith.constant 0 : index
    %2 = vector.load %arg2[%c0_2, %c0_3, %c0_4, %c0_5] : memref<3x2x8x1xf32, #tpu.memory_space<vmem>>, vector<3x2x8x1xf32>
    %c0_6 = arith.constant 0 : index
    %c0_7 = arith.constant 0 : index
    %c0_8 = arith.constant 0 : index
    %3 = vector.load %arg3[%c0_6, %c0_7, %c0_8] : memref<3x8x1xf32, #tpu.memory_space<vmem>>, vector<3x8x1xf32>
    %c0_9 = arith.constant 0 : index
    %c0_10 = arith.constant 0 : index
    %c0_11 = arith.constant 0 : index
    %4 = vector.load %arg4[%c0_9, %c0_10, %c0_11] : memref<3x8x1xf32, #tpu.memory_space<vmem>>, vector<3x8x1xf32>
    %5 = tpu.iota {dimensions = array<i32: 1>} : vector<8x128xi32>
    %6 = vector.extract_strided_slice %3 {offsets = [0, 0, 0], sizes = [1, 8, 1], strides = [1, 1, 1]} : vector<3x8x1xf32> to vector<1x8x1xf32>
    %7 = vector.shape_cast %6 : vector<1x8x1xf32> to vector<8x1xf32>
    %8 = vector.shape_cast %7 : vector<8x1xf32> to vector<8x1xf32>
    %9 = vector.broadcast %8 : vector<8x1xf32> to vector<8x128xf32>
    %c1_i32 = arith.constant 1 : i32
    %10 = vector.broadcast %c1_i32 : i32 to vector<8x128xi32>
    %11 = arith.cmpi sge, %5, %10 : vector<8x128xi32>
    %c1_i32_12 = arith.constant 1 : i32
    %12 = tpu.dynamic_rotate %1 by %c1_i32_12 dim 1 : vector<8x128xf32>, i32 -> vector<8x128xf32>
    %cst = arith.constant 0.000000e+00 : f32
    %13 = vector.broadcast %cst : f32 to vector<8x128xf32>
    %14 = arith.select %11, %12, %13 : vector<8x128xi1>, vector<8x128xf32>
    %15 = vector.extract_strided_slice %2 {offsets = [0, 0, 0, 0], sizes = [1, 1, 8, 1], strides = [1, 1, 1, 1]} : vector<3x2x8x1xf32> to vector<1x1x8x1xf32>
    %16 = vector.shape_cast %15 : vector<1x1x8x1xf32> to vector<8x1xf32>
    %17 = vector.broadcast %16 : vector<8x1xf32> to vector<8x128xf32>
    %18 = arith.mulf %17, %14 : vector<8x128xf32>
    %19 = arith.addf %9, %18 : vector<8x128xf32>
    %20 = vector.extract_strided_slice %2 {offsets = [0, 1, 0, 0], sizes = [1, 1, 8, 1], strides = [1, 1, 1, 1]} : vector<3x2x8x1xf32> to vector<1x1x8x1xf32>
    %21 = vector.shape_cast %20 : vector<1x1x8x1xf32> to vector<8x1xf32>
    %22 = vector.broadcast %21 : vector<8x1xf32> to vector<8x128xf32>
    %23 = arith.mulf %22, %1 : vector<8x128xf32>
    %24 = arith.addf %19, %23 : vector<8x128xf32>
    %25 = vector.extract_strided_slice %4 {offsets = [0, 0, 0], sizes = [1, 8, 1], strides = [1, 1, 1]} : vector<3x8x1xf32> to vector<1x8x1xf32>
    %26 = vector.shape_cast %25 : vector<1x8x1xf32> to vector<8x1xf32>
    %cst_13 = arith.constant 0.000000e+00 : f32
    %27 = vector.broadcast %cst_13 : f32 to vector<8x128xf32>
    %28 = arith.cmpf oge, %24, %27 : vector<8x128xf32>
    %29 = vector.broadcast %26 : vector<8x1xf32> to vector<8x128xf32>
    %30 = arith.mulf %29, %24 : vector<8x128xf32>
    %31 = arith.select %28, %24, %30 : vector<8x128xi1>, vector<8x128xf32>
    %32 = vector.extract_strided_slice %3 {offsets = [1, 0, 0], sizes = [1, 8, 1], strides = [1, 1, 1]} : vector<3x8x1xf32> to vector<1x8x1xf32>
    %33 = vector.shape_cast %32 : vector<1x8x1xf32> to vector<8x1xf32>
    %34 = vector.shape_cast %33 : vector<8x1xf32> to vector<8x1xf32>
    %35 = vector.broadcast %34 : vector<8x1xf32> to vector<8x128xf32>
    %c2_i32 = arith.constant 2 : i32
    %36 = vector.broadcast %c2_i32 : i32 to vector<8x128xi32>
    %37 = arith.cmpi sge, %5, %36 : vector<8x128xi32>
    %c2_i32_14 = arith.constant 2 : i32
    %38 = tpu.dynamic_rotate %31 by %c2_i32_14 dim 1 : vector<8x128xf32>, i32 -> vector<8x128xf32>
    %cst_15 = arith.constant 0.000000e+00 : f32
    %39 = vector.broadcast %cst_15 : f32 to vector<8x128xf32>
    %40 = arith.select %37, %38, %39 : vector<8x128xi1>, vector<8x128xf32>
    %41 = vector.extract_strided_slice %2 {offsets = [1, 0, 0, 0], sizes = [1, 1, 8, 1], strides = [1, 1, 1, 1]} : vector<3x2x8x1xf32> to vector<1x1x8x1xf32>
    %42 = vector.shape_cast %41 : vector<1x1x8x1xf32> to vector<8x1xf32>
    %43 = vector.broadcast %42 : vector<8x1xf32> to vector<8x128xf32>
    %44 = arith.mulf %43, %40 : vector<8x128xf32>
    %45 = arith.addf %35, %44 : vector<8x128xf32>
    %46 = vector.extract_strided_slice %2 {offsets = [1, 1, 0, 0], sizes = [1, 1, 8, 1], strides = [1, 1, 1, 1]} : vector<3x2x8x1xf32> to vector<1x1x8x1xf32>
    %47 = vector.shape_cast %46 : vector<1x1x8x1xf32> to vector<8x1xf32>
    %48 = vector.broadcast %47 : vector<8x1xf32> to vector<8x128xf32>
    %49 = arith.mulf %48, %31 : vector<8x128xf32>
    %50 = arith.addf %45, %49 : vector<8x128xf32>
    %51 = arith.addf %50, %31 : vector<8x128xf32>
    %52 = vector.extract_strided_slice %4 {offsets = [1, 0, 0], sizes = [1, 8, 1], strides = [1, 1, 1]} : vector<3x8x1xf32> to vector<1x8x1xf32>
    %53 = vector.shape_cast %52 : vector<1x8x1xf32> to vector<8x1xf32>
    %cst_16 = arith.constant 0.000000e+00 : f32
    %54 = vector.broadcast %cst_16 : f32 to vector<8x128xf32>
    %55 = arith.cmpf oge, %51, %54 : vector<8x128xf32>
    %56 = vector.broadcast %53 : vector<8x1xf32> to vector<8x128xf32>
    %57 = arith.mulf %56, %51 : vector<8x128xf32>
    %58 = arith.select %55, %51, %57 : vector<8x128xi1>, vector<8x128xf32>
    %59 = vector.extract_strided_slice %3 {offsets = [2, 0, 0], sizes = [1, 8, 1], strides = [1, 1, 1]} : vector<3x8x1xf32> to vector<1x8x1xf32>
    %60 = vector.shape_cast %59 : vector<1x8x1xf32> to vector<8x1xf32>
    %61 = vector.shape_cast %60 : vector<8x1xf32> to vector<8x1xf32>
    %62 = vector.broadcast %61 : vector<8x1xf32> to vector<8x128xf32>
    %c4_i32 = arith.constant 4 : i32
    %63 = vector.broadcast %c4_i32 : i32 to vector<8x128xi32>
    %64 = arith.cmpi sge, %5, %63 : vector<8x128xi32>
    %c4_i32_17 = arith.constant 4 : i32
    %65 = tpu.dynamic_rotate %58 by %c4_i32_17 dim 1 : vector<8x128xf32>, i32 -> vector<8x128xf32>
    %cst_18 = arith.constant 0.000000e+00 : f32
    %66 = vector.broadcast %cst_18 : f32 to vector<8x128xf32>
    %67 = arith.select %64, %65, %66 : vector<8x128xi1>, vector<8x128xf32>
    %68 = vector.extract_strided_slice %2 {offsets = [2, 0, 0, 0], sizes = [1, 1, 8, 1], strides = [1, 1, 1, 1]} : vector<3x2x8x1xf32> to vector<1x1x8x1xf32>
    %69 = vector.shape_cast %68 : vector<1x1x8x1xf32> to vector<8x1xf32>
    %70 = vector.broadcast %69 : vector<8x1xf32> to vector<8x128xf32>
    %71 = arith.mulf %70, %67 : vector<8x128xf32>
    %72 = arith.addf %62, %71 : vector<8x128xf32>
    %73 = vector.extract_strided_slice %2 {offsets = [2, 1, 0, 0], sizes = [1, 1, 8, 1], strides = [1, 1, 1, 1]} : vector<3x2x8x1xf32> to vector<1x1x8x1xf32>
    %74 = vector.shape_cast %73 : vector<1x1x8x1xf32> to vector<8x1xf32>
    %75 = vector.broadcast %74 : vector<8x1xf32> to vector<8x128xf32>
    %76 = arith.mulf %75, %58 : vector<8x128xf32>
    %77 = arith.addf %72, %76 : vector<8x128xf32>
    %78 = arith.addf %77, %58 : vector<8x128xf32>
    %c0_19 = arith.constant 0 : index
    %c0_20 = arith.constant 0 : index
    %79 = vector.load %arg6[%c0_19, %c0_20] : memref<8x1xf32, #tpu.memory_space<vmem>>, vector<8x1xf32>
    %c0_21 = arith.constant 0 : index
    %c0_22 = arith.constant 0 : index
    %80 = vector.load %arg5[%c0_21, %c0_22] : memref<8x8xf32, #tpu.memory_space<vmem>>, vector<8x8xf32>
    %81 = vector.shape_cast %79 : vector<8x1xf32> to vector<8x1xf32>
    %82 = vector.broadcast %81 : vector<8x1xf32> to vector<8x128xf32>
    %83 = vector.extract_strided_slice %80 {offsets = [0, 0], sizes = [8, 1], strides = [1, 1]} : vector<8x8xf32> to vector<8x1xf32>
    %84 = vector.extract_strided_slice %78 {offsets = [0, 0], sizes = [1, 128], strides = [1, 1]} : vector<8x128xf32> to vector<1x128xf32>
    %85 = vector.broadcast %83 : vector<8x1xf32> to vector<8x128xf32>
    %86 = vector.broadcast %84 : vector<1x128xf32> to vector<8x128xf32>
    %87 = arith.mulf %85, %86 : vector<8x128xf32>
    %88 = arith.addf %82, %87 : vector<8x128xf32>
    %89 = vector.extract_strided_slice %80 {offsets = [0, 1], sizes = [8, 1], strides = [1, 1]} : vector<8x8xf32> to vector<8x1xf32>
    %90 = vector.extract_strided_slice %78 {offsets = [1, 0], sizes = [1, 128], strides = [1, 1]} : vector<8x128xf32> to vector<1x128xf32>
    %91 = vector.broadcast %89 : vector<8x1xf32> to vector<8x128xf32>
    %92 = vector.broadcast %90 : vector<1x128xf32> to vector<8x128xf32>
    %93 = arith.mulf %91, %92 : vector<8x128xf32>
    %94 = arith.addf %88, %93 : vector<8x128xf32>
    %95 = vector.extract_strided_slice %80 {offsets = [0, 2], sizes = [8, 1], strides = [1, 1]} : vector<8x8xf32> to vector<8x1xf32>
    %96 = vector.extract_strided_slice %78 {offsets = [2, 0], sizes = [1, 128], strides = [1, 1]} : vector<8x128xf32> to vector<1x128xf32>
    %97 = vector.broadcast %95 : vector<8x1xf32> to vector<8x128xf32>
    %98 = vector.broadcast %96 : vector<1x128xf32> to vector<8x128xf32>
    %99 = arith.mulf %97, %98 : vector<8x128xf32>
    %100 = arith.addf %94, %99 : vector<8x128xf32>
    %101 = vector.extract_strided_slice %80 {offsets = [0, 3], sizes = [8, 1], strides = [1, 1]} : vector<8x8xf32> to vector<8x1xf32>
    %102 = vector.extract_strided_slice %78 {offsets = [3, 0], sizes = [1, 128], strides = [1, 1]} : vector<8x128xf32> to vector<1x128xf32>
    %103 = vector.broadcast %101 : vector<8x1xf32> to vector<8x128xf32>
    %104 = vector.broadcast %102 : vector<1x128xf32> to vector<8x128xf32>
    %105 = arith.mulf %103, %104 : vector<8x128xf32>
    %106 = arith.addf %100, %105 : vector<8x128xf32>
    %c0_23 = arith.constant 0 : index
    %c0_24 = arith.constant 0 : index
    %c0_25 = arith.constant 0 : index
    %107 = vector.load %arg7[%c0_23, %c0_24, %c0_25] : memref<1x8x128xf32, #tpu.memory_space<vmem>>, vector<1x8x128xf32>
    %108 = vector.shape_cast %107 : vector<1x8x128xf32> to vector<8x128xf32>
    %109 = vector.shape_cast %106 : vector<8x128xf32> to vector<1x8x128xf32>
    tpu.vector_store %arg7[%c0_23, %c0_24, %c0_25], %109 {strides = array<i32>} : memref<1x8x128xf32, #tpu.memory_space<vmem>>, vector<1x8x128xf32>,
    return
  }
  func.func @transform_0(%arg0: i32) -> (i32, i32, i32) {
    %c0_i32 = arith.constant 0 : i32
    %c0_i32_0 = arith.constant 0 : i32
    %c0_i32_1 = arith.constant 0 : i32
    return %arg0, %c0_i32, %c0_i32_0 : i32, i32, i32
  }
  func.func @transform_1(%arg0: i32) -> (i32, i32, i32, i32) {
    %c0_i32 = arith.constant 0 : i32
    %c0_i32_0 = arith.constant 0 : i32
    %c0_i32_1 = arith.constant 0 : i32
    %c0_i32_2 = arith.constant 0 : i32
    %c0_i32_3 = arith.constant 0 : i32
    return %c0_i32, %c0_i32_0, %c0_i32_1, %c0_i32_2 : i32, i32, i32, i32
  }
  func.func @transform_2(%arg0: i32) -> (i32, i32, i32) {
    %c0_i32 = arith.constant 0 : i32
    %c0_i32_0 = arith.constant 0 : i32
    %c0_i32_1 = arith.constant 0 : i32
    %c0_i32_2 = arith.constant 0 : i32
    return %c0_i32, %c0_i32_0, %c0_i32_1 : i32, i32, i32
  }
  func.func @transform_3(%arg0: i32) -> (i32, i32, i32) {
    %c0_i32 = arith.constant 0 : i32
    %c0_i32_0 = arith.constant 0 : i32
    %c0_i32_1 = arith.constant 0 : i32
    %c0_i32_2 = arith.constant 0 : i32
    return %c0_i32, %c0_i32_0, %c0_i32_1 : i32, i32, i32
  }
  func.func @transform_4(%arg0: i32) -> (i32, i32) {
    %c0_i32 = arith.constant 0 : i32
    %c0_i32_0 = arith.constant 0 : i32
    %c0_i32_1 = arith.constant 0 : i32
    return %c0_i32, %c0_i32_0 : i32, i32
  }
  func.func @transform_5(%arg0: i32) -> (i32, i32) {
    %c0_i32 = arith.constant 0 : i32
    %c0_i32_0 = arith.constant 0 : i32
    %c0_i32_1 = arith.constant 0 : i32
    return %c0_i32, %c0_i32_0 : i32, i32
  }
  func.func @transform_6(%arg0: i32) -> (i32, i32, i32) {
    %c0_i32 = arith.constant 0 : i32
    %c0_i32_0 = arith.constant 0 : i32
    %c0_i32_1 = arith.constant 0 : i32
    return %arg0, %c0_i32, %c0_i32_0 : i32, i32, i32
  }
}

</mosaic_0001>

<llo_original>
// kernel: depthwise_net_forward.1
$region0: #{depthwise_net_forward.1}
  #allocation0 [shape = 'u32[]', space=smem, size = 0x4, offset = 0x4, fixed_abs, tag = 'smem constant byte address 0x4 - core index']
  #allocation1 [shape = 'u32[144,128]{1,0:T(1,128)}', space=vmem, size = 0x12000, scoped, tag = 'internal scratch']
  %s0 = inlined_call_operand.vmem [shape: f32[2,8,128], index: 0, kind: input, shape index: {}]
  %s1 = inlined_call_operand.vmem [shape: f32[3,2,8,1], index: 1, kind: input, shape index: {}]
  %s2 = inlined_call_operand.vmem [shape: f32[3,8,1], index: 2, kind: input, shape index: {}]
  %s3 = inlined_call_operand.vmem [shape: f32[3,8,1], index: 3, kind: input, shape index: {}]
  %s4 = inlined_call_operand.vmem [shape: f32[8,8], index: 4, kind: input, shape index: {}]
  %s5 = inlined_call_operand.vmem [shape: f32[8,1], index: 5, kind: input, shape index: {}]
  %s6 = inlined_call_operand.vmem [shape: f32[2,8,128], index: 6, kind: output, shape index: {}]
  %s7 = sld [smem:[#allocation0]]
  $region57: #{depthwise_net_forward.1} parent=0
    _
  %s9 = ssub.s32 1, %s7
  %s10 = scalar_select 0, %s9, %s7
  loop: start=0, step=1, limit=4
  $region2: #{depthwise_net_forward.1} parent=0 // loop_pre_header
    _
  $region3: #{depthwise_net_forward.1} parent=0 // loop_header
    %s12 = sphi 0, %s16
    %p13 = scmp.ge.s32.totalorder %s12, 4
    %s22 = sphi 0, %s24
    %s25 = sphi 0, %s22
    %s26 = sphi 0, %s25
    %s42 = sphi 0, %s26
    %s46 = sphi 0, %s46
    %s48 = sphi 0, %s46
    %s49 = sphi 0, %s48
    %s63 = sphi 0, %s49
    %s67 = sphi 0, %s67
    %s69 = sphi 0, %s67
    %s70 = sphi 0, %s69
    %s84 = sphi 0, %s70
    %s88 = sphi 0, %s88
    %s90 = sphi 0, %s88
    %s91 = sphi 0, %s90
    %s105 = sphi 0, %s91
    %s109 = sphi 0, %s109
    %s111 = sphi 0, %s109
    %s112 = sphi 0, %s111
    %s126 = sphi 0, %s112
    %s130 = sphi 0, %s130
    %s132 = sphi 0, %s130
    %s133 = sphi 0, %s132
    %s147 = sphi 0, %s133
    %s153 = sphi 0, %s155
    %s156 = sphi 0, %s153
    %s157 = sphi 0, %s156
    %s173 = sphi 0, %s157
  $region4: #{depthwise_net_forward.1} parent=0 // loop_header_branch
    %15 = sbr.rel (%p13) target = $region8
  $region5: #{depthwise_net_forward.1} parent=0 // loop_body
    %s17 = ssub.s32 %s12, 1
    %s18 = ssub.s32 %s12, 2
    %s19 = sadd.s32 %s12, 1
    %s20 = ssub.s32 %s12, %s19
    %p21 = scmp.eq.s32.totalorder %s20, 0
    %s23 = sadd.s32 %s22, 1
    %s24 = scalar_select %p21, %s22, %s23
    %p27 = pneg %p21
    %p28 = scmp.eq.s32.totalorder %s12, 1
    %p29 = por %p27, %p28
    %p30 = scmp.ne.s32.totalorder %s22, %s25
    %p31 = scmp.eq.s32.totalorder %s12, 0
    %p32 = por %p30, %p31
    %p33 = scmp.ne.s32.totalorder %s22, %s25
    %p34 = scmp.eq.s32.totalorder %s17, 1
    %p35 = por %p33, %p34
    %p36 = scmp.ne.s32.totalorder %s25, %s26
    %p37 = scmp.eq.s32.totalorder %s17, 0
    %p38 = por %p36, %p37
    %p39 = scmp.ne.s32.totalorder %s25, %s26
    %p40 = scmp.eq.s32.totalorder %s18, 1
    %p41 = por %p39, %p40
    %p43 = scmp.ne.s32.totalorder %s26, %s42
    %p44 = scmp.eq.s32.totalorder %s18, 0
    %p45 = por %p43, %p44
    %s47 = sadd.s32 %s46, 1
    %p50 = scmp.eq.s32.totalorder %s12, 1
    %p51 = scmp.ne.s32.totalorder %s46, %s48
    %p52 = scmp.eq.s32.totalorder %s12, 0
    %p53 = por %p51, %p52
    %p54 = scmp.ne.s32.totalorder %s46, %s48
    %p55 = scmp.eq.s32.totalorder %s17, 1
    %p56 = por %p54, %p55
    %p57 = scmp.ne.s32.totalorder %s48, %s49
    %p58 = scmp.eq.s32.totalorder %s17, 0
    %p59 = por %p57, %p58
    %p60 = scmp.ne.s32.totalorder %s48, %s49
    %p61 = scmp.eq.s32.totalorder %s18, 1
    %p62 = por %p60, %p61
    %p64 = scmp.ne.s32.totalorder %s49, %s63
    %p65 = scmp.eq.s32.totalorder %s18, 0
    %p66 = por %p64, %p65
    %s68 = sadd.s32 %s67, 1
    %p71 = scmp.eq.s32.totalorder %s12, 1
    %p72 = scmp.ne.s32.totalorder %s67, %s69
    %p73 = scmp.eq.s32.totalorder %s12, 0
    %p74 = por %p72, %p73
    %p75 = scmp.ne.s32.totalorder %s67, %s69
    %p76 = scmp.eq.s32.totalorder %s17, 1
    %p77 = por %p75, %p76
    %p78 = scmp.ne.s32.totalorder %s69, %s70
    %p79 = scmp.eq.s32.totalorder %s17, 0
    %p80 = por %p78, %p79
    %p81 = scmp.ne.s32.totalorder %s69, %s70
    %p82 = scmp.eq.s32.totalorder %s18, 1
    %p83 = por %p81, %p82
    %p85 = scmp.ne.s32.totalorder %s70, %s84
    %p86 = scmp.eq.s32.totalorder %s18, 0
    %p87 = por %p85, %p86
    %s89 = sadd.s32 %s88, 1
    %p92 = scmp.eq.s32.totalorder %s12, 1
    %p93 = scmp.ne.s32.totalorder %s88, %s90
    %p94 = scmp.eq.s32.totalorder %s12, 0
    %p95 = por %p93, %p94
    %p96 = scmp.ne.s32.totalorder %s88, %s90
    %p97 = scmp.eq.s32.totalorder %s17, 1
    %p98 = por %p96, %p97
    %p99 = scmp.ne.s32.totalorder %s90, %s91
    %p100 = scmp.eq.s32.totalorder %s17, 0
    %p101 = por %p99, %p100
    %p102 = scmp.ne.s32.totalorder %s90, %s91
    %p103 = scmp.eq.s32.totalorder %s18, 1
    %p104 = por %p102, %p103
    %p106 = scmp.ne.s32.totalorder %s91, %s105
    %p107 = scmp.eq.s32.totalorder %s18, 0
    %p108 = por %p106, %p107
    %s110 = sadd.s32 %s109, 1
    %p113 = scmp.eq.s32.totalorder %s12, 1
    %p114 = scmp.ne.s32.totalorder %s109, %s111
    %p115 = scmp.eq.s32.totalorder %s12, 0
    %p116 = por %p114, %p115
    %p117 = scmp.ne.s32.totalorder %s109, %s111
    %p118 = scmp.eq.s32.totalorder %s17, 1
    %p119 = por %p117, %p118
    %p120 = scmp.ne.s32.totalorder %s111, %s112
    %p121 = scmp.eq.s32.totalorder %s17, 0
    %p122 = por %p120, %p121
    %p123 = scmp.ne.s32.totalorder %s111, %s112
    %p124 = scmp.eq.s32.totalorder %s18, 1
    %p125 = por %p123, %p124
    %p127 = scmp.ne.s32.totalorder %s112, %s126
    %p128 = scmp.eq.s32.totalorder %s18, 0
    %p129 = por %p127, %p128
    %s131 = sadd.s32 %s130, 1
    %p134 = scmp.eq.s32.totalorder %s12, 1
    %p135 = scmp.ne.s32.totalorder %s130, %s132
    %p136 = scmp.eq.s32.totalorder %s12, 0
    %p137 = por %p135, %p136
    %p138 = scmp.ne.s32.totalorder %s130, %s132
    %p139 = scmp.eq.s32.totalorder %s17, 1
    %p140 = por %p138, %p139
    %p141 = scmp.ne.s32.totalorder %s132, %s133
    %p142 = scmp.eq.s32.totalorder %s17, 0
    %p143 = por %p141, %p142
    %p144 = scmp.ne.s32.totalorder %s132, %s133
    %p145 = scmp.eq.s32.totalorder %s18, 1
    %p146 = por %p144, %p145
    %p148 = scmp.ne.s32.totalorder %s133, %s147
    %p149 = scmp.eq.s32.totalorder %s18, 0
    %p150 = por %p148, %p149
    %s151 = ssub.s32 %s12, %s19
    %p152 = scmp.eq.s32.totalorder %s151, 0
    %s154 = sadd.s32 %s153, 1
    %s155 = scalar_select %p152, %s153, %s154
    %p158 = pneg %p152
    %p159 = scmp.eq.s32.totalorder %s12, 1
    %p160 = por %p158, %p159
    %p161 = scmp.ne.s32.totalorder %s153, %s156
    %p162 = scmp.eq.s32.totalorder %s12, 0
    %p163 = por %p161, %p162
    %p164 = scmp.ne.s32.totalorder %s153, %s156
    %p165 = scmp.eq.s32.totalorder %s17, 1
    %p166 = por %p164, %p165
    %p167 = scmp.ne.s32.totalorder %s156, %s157
    %p168 = scmp.eq.s32.totalorder %s17, 0
    %p169 = por %p167, %p168
    %p170 = scmp.ne.s32.totalorder %s156, %s157
    %p171 = scmp.eq.s32.totalorder %s18, 1
    %p172 = por %p170, %p171
    %p174 = scmp.ne.s32.totalorder %s157, %s173
    %p175 = scmp.eq.s32.totalorder %s18, 0
    %p176 = por %p174, %p175
    %p177 = scmp.le.s32.totalorder 1, %s12
    %p178 = scmp.lt.s32.totalorder %s12, 3
    %p179 = pnand %p177, %p178
    %p180 = pneg %p179
    // Predicated region
    $region9: #{depthwise_net_forward.1} parent=5 // pred_check
      _
    $region10: #{depthwise_net_forward.1} parent=5 // pred_check_branch
      %182 = sbr.rel (%p179) target = $region12
    $region11: #{depthwise_net_forward.1} parent=5 // pred_region
      %s183 = ssub.s32 %s12, 1
      // Predicated region
      $region13: #{depthwise_net_forward.1} parent=11 // pred_check
        %p184 = pneg %p59
      $region14: #{depthwise_net_forward.1} parent=11 // pred_check_branch
        %186 = sbr.rel (%p184) target = $region16
      $region15: #{depthwise_net_forward.1} parent=11 // pred_region
        _
      $region16: #{depthwise_net_forward.1} parent=11 // pred_fallthru
        _
      // Predicated region
      $region17: #{depthwise_net_forward.1} parent=11 // pred_check
        %p187 = pneg %p80
      $region18: #{depthwise_net_forward.1} parent=11 // pred_check_branch
        %189 = sbr.rel (%p187) target = $region20
      $region19: #{depthwise_net_forward.1} parent=11 // pred_region
        _
      $region20: #{depthwise_net_forward.1} parent=11 // pred_fallthru
        _
      // Predicated region
      $region21: #{depthwise_net_forward.1} parent=11 // pred_check
        %p190 = pneg %p101
      $region22: #{depthwise_net_forward.1} parent=11 // pred_check_branch
        %192 = sbr.rel (%p190) target = $region24
      $region23: #{depthwise_net_forward.1} parent=11 // pred_region
        _
      $region24: #{depthwise_net_forward.1} parent=11 // pred_fallthru
        _
      // Predicated region
      $region25: #{depthwise_net_forward.1} parent=11 // pred_check
        %p193 = pneg %p122
      $region26: #{depthwise_net_forward.1} parent=11 // pred_check_branch
        %195 = sbr.rel (%p193) target = $region28
      $region27: #{depthwise_net_forward.1} parent=11 // pred_region
        _
      $region28: #{depthwise_net_forward.1} parent=11 // pred_fallthru
        _
      // Predicated region
      $region29: #{depthwise_net_forward.1} parent=11 // pred_check
        %p196 = pneg %p143
      $region30: #{depthwise_net_forward.1} parent=11 // pred_check_branch
        %198 = sbr.rel (%p196) target = $region32
      $region31: #{depthwise_net_forward.1} parent=11 // pred_region
        _
      $region32: #{depthwise_net_forward.1} parent=11 // pred_fallthru
        _
    $region12: #{depthwise_net_forward.1} parent=5 // pred_fallthru
      _
    %p199 = scmp.lt.s32.totalorder %s12, 2
    // Predicated region
    $region33: #{depthwise_net_forward.1} parent=5 // pred_check
      %p200 = pneg %p199
    $region34: #{depthwise_net_forward.1} parent=5 // pred_check_branch
      %202 = sbr.rel (%p200) target = $region36
    $region35: #{depthwise_net_forward.1} parent=5 // pred_region
      // Predicated region
      $region37: #{depthwise_net_forward.1} parent=35 // pred_check
        %p203 = pneg %p32
      $region38: #{depthwise_net_forward.1} parent=35 // pred_check_branch
        %205 = sbr.rel (%p203) target = $region40
      $region39: #{depthwise_net_forward.1} parent=35 // pred_region
        %p206 = scmp.lt.s32.totalorder %s12, 1
        %s207 = scalar_select %p206, %s12, 1
        %s208 = smul.addr %s207, 8
        %s209 = scalar_lea.vmem %s0, %s208
      $region40: #{depthwise_net_forward.1} parent=35 // pred_fallthru
        _
    $region36: #{depthwise_net_forward.1} parent=5 // pred_fallthru
      _
    %p210 = scmp.le.s32.totalorder 1, %s12
    %p211 = scmp.lt.s32.totalorder %s12, 3
    %p212 = pnand %p210, %p211
    %p213 = pneg %p212
    // Predicated region
    $region41: #{depthwise_net_forward.1} parent=5 // pred_check
      _
    $region42: #{depthwise_net_forward.1} parent=5 // pred_check_branch
      %215 = sbr.rel (%p212) target = $region44
    $region43: #{depthwise_net_forward.1} parent=5 // pred_region
      %s216 = ssub.s32 %s12, 1
      %p217 = scmp.lt.s32.totalorder %s17, 1
      %s218 = scalar_select %p217, %s17, 1
      %s219 = smul.addr %s218, 8
      %s220 = scalar_lea.vmem %s0, %s219
      %p221 = pneg %p38
      %p222 = pneg %p35
      %p223 = pneg %p59
      %p224 = pneg %p56
      %p225 = pneg %p80
      %p226 = pneg %p77
      %p227 = pneg %p101
      %p228 = pneg %p98
      %p229 = pneg %p122
      %p230 = pneg %p119
      %p231 = pneg %p143
      %p232 = pneg %p140
      %p233 = pneg %p169
      %p234 = pneg %p166
      %p235 = scmp.lt.s32.totalorder %s17, 1
      %s236 = scalar_select %p235, %s17, 1
      %s237 = smul.addr %s236, 8
      %s238 = scalar_lea.vmem %s6, %s237
      %p239 = scmp.lt.s32.totalorder %s17, 1
      %s240 = scalar_select %p239, %s17, 1
      %s241 = smul.addr %s240, 8
      %s242 = scalar_lea.vmem %s0, %s241
      %p243 = scmp.lt.s32.totalorder %s17, 1
      %s244 = scalar_select %p243, %s17, 1
      %s245 = smul.addr %s244, 8
      %s246 = scalar_lea.vmem %s6, %s245
      %v247 = vld [vmem:[%s242] sm:$0xff]
      %v248 = vld [vmem:[%s1] sm:$0xff]
      %v249 = vld [vmem:[%s1 + $0x8] sm:$0xff]
      %v250 = vld [vmem:[%s1 + $0x10] sm:$0xff]
      %v251 = vld [vmem:[%s1 + $0x18] sm:$0xff]
      %v252 = vld [vmem:[%s1 + $0x20] sm:$0xff]
      %v253 = vld [vmem:[%s1 + $0x28] sm:$0xff]
      %v254 = vld [vmem:[%s2] sm:$0xff]
      %v255 = vld [vmem:[%s2 + $0x8] sm:$0xff]
      %v256 = vld [vmem:[%s2 + $0x10] sm:$0xff]
      %v257 = vld [vmem:[%s3] sm:$0xff]
      %v258 = vld [vmem:[%s3 + $0x8] sm:$0xff]
      %v259 = vlaneseq
      %v260 = vand.u32 %v259, 127
      %262 = vset.pattern.permute.xlu0 0
      %263 = vperm.xlu0 %262, %v254
      %v264 = vpop.permute.xlu0 %263
      %vm266 = vcmp.ge.s32.totalorder %v260, 1
      %267 = vrot.lane.b32.xlu0 %v247, 1
      %v268 = vpop.permute.xlu0 %267
      %v269 = vsel %vm266, %v268, 0.0
      %271 = vset.pattern.permute.xlu0 0
      %272 = vperm.xlu0 %271, %v248
      %v273 = vpop.permute.xlu0 %272
      %v275 = vmul.f32 %v273, %v269
      %v276 = vadd.f32 %v264, %v275
      %278 = vset.pattern.permute.xlu0 0
      %279 = vperm.xlu0 %278, %v249
      %v280 = vpop.permute.xlu0 %279
      %v282 = vmul.f32 %v280, %v247
      %v283 = vadd.f32 %v276, %v282
      %vm284 = vcmp.ge.f32.partialorder %v283, 0.0
      %286 = vset.pattern.permute.xlu0 0
      %287 = vperm.xlu0 %286, %v257
      %v288 = vpop.permute.xlu0 %287
      %v290 = vmul.f32 %v288, %v283
      %v291 = vsel %vm284, %v283, %v290
      %293 = vset.pattern.permute.xlu0 0
      %294 = vperm.xlu0 %293, %v255
      %v295 = vpop.permute.xlu0 %294
      %vm297 = vcmp.ge.s32.totalorder %v260, 2
      %298 = vrot.lane.b32.xlu0 %v291, 2
      %v299 = vpop.permute.xlu0 %298
      %v300 = vsel %vm297, %v299, 0.0
      %302 = vset.pattern.permute.xlu0 0
      %303 = vperm.xlu0 %302, %v250
      %v304 = vpop.permute.xlu0 %303
      %v306 = vmul.f32 %v304, %v300
      %v307 = vadd.f32 %v295, %v306
      %309 = vset.pattern.permute.xlu0 0
      %310 = vperm.xlu0 %309, %v251
      %v311 = vpop.permute.xlu0 %310
      %v313 = vmul.f32 %v311, %v291
      %v314 = vadd.f32 %v307, %v313
      %v315 = vadd.f32 %v314, %v291
      %vm316 = vcmp.ge.f32.partialorder %v315, 0.0
      %318 = vset.pattern.permute.xlu0 0
      %319 = vperm.xlu0 %318, %v258
      %v320 = vpop.permute.xlu0 %319
      %v322 = vmul.f32 %v320, %v315
      %v323 = vsel %vm316, %v315, %v322
      %325 = vset.pattern.permute.xlu0 0
      %326 = vperm.xlu0 %325, %v256
      %v327 = vpop.permute.xlu0 %326
      %vm329 = vcmp.ge.s32.totalorder %v260, 4
      %330 = vrot.lane.b32.xlu0 %v323, 4
      %v331 = vpop.permute.xlu0 %330
      %v332 = vsel %vm329, %v331, 0.0
      %334 = vset.pattern.permute.xlu0 0
      %335 = vperm.xlu0 %334, %v252
      %v336 = vpop.permute.xlu0 %335
      %v338 = vmul.f32 %v336, %v332
      %v339 = vadd.f32 %v327, %v338
      %341 = vset.pattern.permute.xlu0 0
      %342 = vperm.xlu0 %341, %v253
      %v343 = vpop.permute.xlu0 %342
      %v345 = vmul.f32 %v343, %v323
      %v346 = vadd.f32 %v339, %v345
      %v347 = vadd.f32 %v346, %v323
      %v348 = vld [vmem:[%s5] sm:$0xff]
      %v349 = vld [vmem:[%s4] sm:$0xff]
      %351 = vset.pattern.permute.xlu0 0
      %352 = vperm.xlu0 %351, %v348
      %v353 = vpop.permute.xlu0 %352
      %356 = vset.pattern.permute.xlu0 0
      %357 = vperm.xlu0 %356, %v349
      %v358 = vpop.permute.xlu0 %357
      %v360 = vlaneseq
      %v361 = vshrl.u32 %v360, 7
      %v362 = vsub.s32 0, %v361
      %v363 = vrot.slane %v347, %v362
      %v364 = vmul.f32 %v358, %v363
      %v365 = vadd.f32 %v353, %v364
      %366 = vset.pattern.permute.xlu0 1
      %367 = vperm.xlu0 %366, %v349
      %v368 = vpop.permute.xlu0 %367
      %v370 = vlaneseq
      %v371 = vshrl.u32 %v370, 7
      %v372 = vsub.s32 1, %v371
      %v373 = vrot.slane %v347, %v372
      %v374 = vmul.f32 %v368, %v373
      %v375 = vadd.f32 %v365, %v374
      %376 = vset.pattern.permute.xlu0 2
      %377 = vperm.xlu0 %376, %v349
      %v378 = vpop.permute.xlu0 %377
      %v380 = vlaneseq
      %v381 = vshrl.u32 %v380, 7
      %v382 = vsub.s32 2, %v381
      %v383 = vrot.slane %v347, %v382
      %v384 = vmul.f32 %v378, %v383
      %v385 = vadd.f32 %v375, %v384
      %386 = vset.pattern.permute.xlu0 3
      %387 = vperm.xlu0 %386, %v349
      %v388 = vpop.permute.xlu0 %387
      %v390 = vlaneseq
      %v391 = vshrl.u32 %v390, 7
      %v392 = vsub.s32 3, %v391
      %v393 = vrot.slane %v347, %v392
      %v394 = vmul.f32 %v388, %v393
      %v395 = vadd.f32 %v385, %v394
      %396 = vst [vmem:[%s246] sm:$0xff] %v395
      %p397 = scmp.lt.s32.totalorder %s17, 1
      %s398 = scalar_select %p397, %s17, 1
      %s399 = smul.addr %s398, 8
      %s400 = scalar_lea.vmem %s6, %s399
      // Predicated region
      $region45: #{depthwise_net_forward.1} parent=43 // pred_check
        %p401 = pneg %p166
      $region46: #{depthwise_net_forward.1} parent=43 // pred_check_branch
        %403 = sbr.rel (%p401) target = $region48
      $region47: #{depthwise_net_forward.1} parent=43 // pred_region
        _
      $region48: #{depthwise_net_forward.1} parent=43 // pred_fallthru
        _
    $region44: #{depthwise_net_forward.1} parent=5 // pred_fallthru
      _
    %p404 = scmp.le.s32.totalorder 2, %s12
    // Predicated region
    $region49: #{depthwise_net_forward.1} parent=5 // pred_check
      %p405 = pneg %p404
    $region50: #{depthwise_net_forward.1} parent=5 // pred_check_branch
      %407 = sbr.rel (%p405) target = $region52
    $region51: #{depthwise_net_forward.1} parent=5 // pred_region
      %s408 = ssub.s32 %s12, 2
      // Predicated region
      $region53: #{depthwise_net_forward.1} parent=51 // pred_check
        %p409 = pneg %p172
      $region54: #{depthwise_net_forward.1} parent=51 // pred_check_branch
        %411 = sbr.rel (%p409) target = $region56
      $region55: #{depthwise_net_forward.1} parent=51 // pred_region
        %p412 = scmp.lt.s32.totalorder %s18, 1
        %s413 = scalar_select %p412, %s18, 1
        %s414 = smul.addr %s413, 8
        %s415 = scalar_lea.vmem %s6, %s414
      $region56: #{depthwise_net_forward.1} parent=51 // pred_fallthru
        _
    $region52: #{depthwise_net_forward.1} parent=5 // pred_fallthru
      _
  $region6: #{depthwise_net_forward.1} parent=0 // loop_footer
    %s16 = sadd.s32 1, %s12
  $region7: #{depthwise_net_forward.1} parent=0 // loop_footer_branch
    %11 = sbr.rel target = $region3
  $region8: #{depthwise_net_forward.1} parent=0 // loop_exit
    _

</llo_original>
